<compile_context>
chip_gen: v5e
topology: v5e:2x2
jax: 0.10.0
libtpu: 0.0.40
codegen_flags: <defaults>
</compile_context>

<pallas_src>
import math
import jax
import jax.numpy as jnp
from jax.experimental import pallas as pl
from jax.experimental.pallas import tpu as pltpu

# ---- model hyperparameters (small, consistent with the module) ----
B = 2        # batch
S = 8        # sequence length
D = 32       # d_model
H = 4        # n_heads
DK = D // H  # d_k = d_v
P_DROP = 0.1  # unused at inference
EPS = 1e-6


def encoder_layer_kernel(x_ref, mask_ref, wqkv_ref, bqkv_ref, wo_ref, bo_ref,
                         gamma_ref, beta_ref, out_ref, attnw_ref):
    x = x_ref[...]                                   # (B*S, D) f32
    wo = wo_ref[...]                                 # (D, D)

    # Fused QKV projection: single MXU push, 3*D (= 96) output lanes.
    qkv = jnp.dot(x, wqkv_ref[...],
                  preferred_element_type=jnp.float32) + bqkv_ref[...]
    q = qkv[:, 0:D]
    k = qkv[:, D:2 * D]
    v = qkv[:, 2 * D:3 * D]

    # Additive attention bias, computed once (nonzero mask => -1e9).
    bias = jnp.where(mask_ref[...] > 0,
                     jnp.float32(-1e9), jnp.float32(0.0))        # (B*S, S)

    scale = jnp.float32(1.0 / math.sqrt(DK))

    proj_rows = []     # per-batch (S, D) attention-output projections
    attnw_rows = []    # per-batch (S, H*S) lane-dense attention weights
    for b in range(B):            # static unroll over batch (B = 2)
        r0, r1 = b * S, (b + 1) * S
        bias_b = bias[r0:r1, :]                      # (S, S)
        acc = None
        head_ps = []
        for h in range(H):        # static unroll over heads (H = 4)
            c0, c1 = h * DK, (h + 1) * DK
            qh = q[r0:r1, c0:c1]                     # (S, DK)
            kh = k[r0:r1, c0:c1]                     # (S, DK)
            vh = v[r0:r1, c0:c1]                     # (S, DK)

            scores = (jnp.dot(qh, kh.T, preferred_element_type=jnp.float32)
                      * scale + bias_b)                            # (S, S)
            m = jnp.max(scores, axis=-1, keepdims=True)
            e = jnp.exp(scores - m)
            p = e * pl.reciprocal(jnp.sum(e, axis=-1, keepdims=True),
                                  approx=True)                     # (S, S)
            head_ps.append(p)

            ctx = jnp.dot(p, vh, preferred_element_type=jnp.float32)   # (S, DK)
            contrib = jnp.dot(ctx, wo[c0:c1, :],
                              preferred_element_type=jnp.float32)      # (S, D)
            acc = contrib if acc is None else acc + contrib

        proj_rows.append(acc)
        attnw_rows.append(jnp.concatenate(head_ps, axis=-1))   # (S, H*S)

    proj = jnp.concatenate(proj_rows, axis=0) + bo_ref[...]    # (B*S, D)

    # dropout1 == identity at inference; residual + LayerNorm(eps=1e-6).
    r = x + proj
    mu = jnp.mean(r, axis=-1, keepdims=True)
    diff = r - mu
    var = jnp.mean(diff * diff, axis=-1, keepdims=True)
    normed = diff * jax.lax.rsqrt(var + EPS)
    out_ref[...] = (normed * gamma_ref[...] + beta_ref[...]).astype(out_ref.dtype)

    # Single lane-dense store of all attention weights.
    attnw_ref[...] = jnp.concatenate(attnw_rows, axis=0)       # (B*S, H*S)


def encoder_layer(x, attn_mask, params):
    """x: (B, S, D) f32; attn_mask: (B, S, S) int32 (nonzero = masked)."""
    wqkv, bqkv, wo, bo, gamma, beta = params

    # Fold batch onto the sublane axis; everything lives in VMEM, no grid.
    x2 = x.reshape(B * S, D)
    mask2 = attn_mask.reshape(B * S, S)

    vmem = pl.BlockSpec(memory_space=pltpu.MemorySpace.VMEM)

    out2, attnw2 = pl.pallas_call(
        encoder_layer_kernel,
        out_shape=(
            jax.ShapeDtypeStruct((B * S, D), jnp.float32),
            jax.ShapeDtypeStruct((B * S, H * S), jnp.float32),
        ),
        in_specs=[vmem] * 8,
        out_specs=(vmem, vmem),
    )(x2, mask2, wqkv, bqkv, wo, bo, gamma, beta)

    out = out2.reshape(B, S, D)
    # attnw2[b*S + s, h*S + t] == attn_weights[b, h, s, t]
    attn_w = attnw2.reshape(B, S, H, S).transpose(0, 2, 1, 3)
    return out, attn_w


def init_params(key):
    """Deterministic parameter init.  Linear weights are stored pre-transposed
    as (D_in, D_out) so the kernel computes x @ W directly (same math as
    PyTorch's x @ W.T with W of shape (D_out, D_in)).  Q/K/V weights are
    packed into one (D, 3D) matrix for the fused projection."""
    ks = jax.random.split(key, 8)

    def lin(kw, kb):
        w = jax.random.normal(kw, (D, D), jnp.float32) * 0.05   # (D_in, D_out)
        b = jax.random.normal(kb, (1, D), jnp.float32) * 0.01
        return w, b

    wq, bq = lin(ks[0], ks[1])
    wk, bk = lin(ks[2], ks[3])
    wv, bv = lin(ks[4], ks[5])
    wo, bo = lin(ks[6], ks[7])
    wqkv = jnp.concatenate([wq, wk, wv], axis=1)      # (D, 3D)
    bqkv = jnp.concatenate([bq, bk, bv], axis=1)      # (1, 3D)
    gamma = jnp.ones((1, D), jnp.float32)
    beta = jnp.zeros((1, D), jnp.float32)
    return (wqkv, bqkv, wo, bo, gamma, beta)


if __name__ == "__main__":
    key = jax.random.PRNGKey(0)
    k_x, k_p = jax.random.split(key)

    x = jax.random.normal(k_x, (B, S, D), jnp.float32)

    # Padding-style mask: batch 0 attends to all 8 keys, batch 1 masks last 2.
    valid_len = jnp.array([S, S - 2], dtype=jnp.int32)                   # (B,)
    key_idx = jnp.arange(S, dtype=jnp.int32)[None, None, :]              # (1,1,S)
    attn_mask = (key_idx >= valid_len[:, None, None]).astype(jnp.int32)  # (B,S,S)
    attn_mask = jnp.broadcast_to(attn_mask, (B, S, S))

    params = init_params(k_p)

    out, attn_w = encoder_layer(x, attn_mask, params)
    jax.block_until_ready((out, attn_w))

    assert out.shape == (B, S, D)
    assert attn_w.shape == (B, H, S, S)
    # Masked keys must carry ~zero attention weight in batch 1.
    assert float(jnp.max(jnp.abs(attn_w[1, :, :, S - 2:]))) < 1e-6
    print("KERNEL_OK")
</pallas_src>

<mosaic_0001>
module attributes {stable_mosaic.version = 11 : i64} {
  func.func @encoder_layer_kernel(%arg0: memref<16x32xf32, #tpu.memory_space<vmem>>, %arg1: memref<16x8xi32, #tpu.memory_space<vmem>>, %arg2: memref<32x96xf32, #tpu.memory_space<vmem>>, %arg3: memref<1x96xf32, #tpu.memory_space<vmem>>, %arg4: memref<32x32xf32, #tpu.memory_space<vmem>>, %arg5: memref<1x32xf32, #tpu.memory_space<vmem>>, %arg6: memref<1x32xf32, #tpu.memory_space<vmem>>, %arg7: memref<1x32xf32, #tpu.memory_space<vmem>>, %arg8: memref<16x32xf32, #tpu.memory_space<vmem>>, %arg9: memref<16x32xf32, #tpu.memory_space<vmem>>) attributes {dimension_semantics = [], scalar_prefetch = 0 : i64, scratch_operands = 0 : i64, tpu.core_type = #tpu.core_type<tc>} {
    %c0 = arith.constant 0 : index
    %c0_0 = arith.constant 0 : index
    %0 = vector.load %arg0[%c0, %c0_0] : memref<16x32xf32, #tpu.memory_space<vmem>>, vector<16x32xf32>
    %c0_1 = arith.constant 0 : index
    %c0_2 = arith.constant 0 : index
    %1 = vector.load %arg4[%c0_1, %c0_2] : memref<32x32xf32, #tpu.memory_space<vmem>>, vector<32x32xf32>
    %c0_3 = arith.constant 0 : index
    %c0_4 = arith.constant 0 : index
    %2 = vector.load %arg2[%c0_3, %c0_4] : memref<32x96xf32, #tpu.memory_space<vmem>>, vector<32x96xf32>
    %cst = arith.constant dense<0.000000e+00> : vector<16x96xf32>
    %3 = tpu.matmul %0, %2, %cst {dimension_numbers = #tpu.dot_dimension_numbers<[1], [0], [0], [1], [0, 0, 1, 1], [], []>} : vector<16x32xf32>, vector<32x96xf32>, vector<16x96xf32> -> vector<16x96xf32>
    %c0_5 = arith.constant 0 : index
    %c0_6 = arith.constant 0 : index
    %4 = vector.load %arg3[%c0_5, %c0_6] : memref<1x96xf32, #tpu.memory_space<vmem>>, vector<1x96xf32>
    %5 = vector.broadcast %4 : vector<1x96xf32> to vector<16x96xf32>
    %6 = arith.addf %3, %5 : vector<16x96xf32>
    %7 = vector.extract_strided_slice %6 {offsets = [0, 0], sizes = [16, 32], strides = [1, 1]} : vector<16x96xf32> to vector<16x32xf32>
    %8 = vector.extract_strided_slice %6 {offsets = [0, 32], sizes = [16, 32], strides = [1, 1]} : vector<16x96xf32> to vector<16x32xf32>
    %9 = vector.extract_strided_slice %6 {offsets = [0, 64], sizes = [16, 32], strides = [1, 1]} : vector<16x96xf32> to vector<16x32xf32>
    %c0_7 = arith.constant 0 : index
    %c0_8 = arith.constant 0 : index
    %10 = vector.load %arg1[%c0_7, %c0_8] : memref<16x8xi32, #tpu.memory_space<vmem>>, vector<16x8xi32>
    %c0_i32 = arith.constant 0 : i32
    %11 = vector.broadcast %c0_i32 : i32 to vector<16x8xi32>
    %12 = arith.cmpi sgt, %10, %11 : vector<16x8xi32>
    %cst_9 = arith.constant -1.000000e+09 : f32
    %cst_10 = arith.constant 0.000000e+00 : f32
    %13 = vector.broadcast %cst_9 : f32 to vector<16x8xf32>
    %14 = vector.broadcast %cst_10 : f32 to vector<16x8xf32>
    %15 = arith.select %12, %13, %14 : vector<16x8xi1>, vector<16x8xf32>
    %16 = vector.extract_strided_slice %15 {offsets = [0, 0], sizes = [8, 8], strides = [1, 1]} : vector<16x8xf32> to vector<8x8xf32>
    %17 = vector.extract_strided_slice %7 {offsets = [0, 0], sizes = [8, 8], strides = [1, 1]} : vector<16x32xf32> to vector<8x8xf32>
    %18 = vector.extract_strided_slice %8 {offsets = [0, 0], sizes = [8, 8], strides = [1, 1]} : vector<16x32xf32> to vector<8x8xf32>
    %19 = vector.extract_strided_slice %9 {offsets = [0, 0], sizes = [8, 8], strides = [1, 1]} : vector<16x32xf32> to vector<8x8xf32>
    %20 = tpu.transpose %18, [1, 0] : vector<8x8xf32> -> vector<8x8xf32>
    %cst_11 = arith.constant dense<0.000000e+00> : vector<8x8xf32>
    %21 = tpu.matmul %17, %20, %cst_11 {dimension_numbers = #tpu.dot_dimension_numbers<[1], [0], [0], [1], [0, 0, 1, 1], [], []>} : vector<8x8xf32>, vector<8x8xf32>, vector<8x8xf32> -> vector<8x8xf32>
    %cst_12 = arith.constant 0.353553385 : f32
    %22 = vector.broadcast %cst_12 : f32 to vector<8x8xf32>
    %23 = arith.mulf %21, %22 : vector<8x8xf32>
    %24 = arith.addf %23, %16 : vector<8x8xf32>
    %cst_13 = arith.constant dense<0xFF800000> : vector<8xf32>
    %25 = vector.multi_reduction <maximumf>, %24, %cst_13 [1] : vector<8x8xf32> to vector<8xf32>
    %26 = vector.shape_cast %25 : vector<8xf32> to vector<8x1xf32>
    %27 = vector.broadcast %26 : vector<8x1xf32> to vector<8x8xf32>
    %28 = arith.subf %24, %27 : vector<8x8xf32>
    %29 = math.exp %28 : vector<8x8xf32>
    %cst_14 = arith.constant dense<0.000000e+00> : vector<8xf32>
    %30 = vector.multi_reduction <add>, %29, %cst_14 [1] : vector<8x8xf32> to vector<8xf32>
    %31 = vector.shape_cast %30 : vector<8xf32> to vector<8x1xf32>
    %32 = tpu.reciprocal %31 {approx = true} : vector<8x1xf32> -> vector<8x1xf32>
    %33 = vector.broadcast %32 : vector<8x1xf32> to vector<8x8xf32>
    %34 = arith.mulf %29, %33 : vector<8x8xf32>
    %cst_15 = arith.constant dense<0.000000e+00> : vector<8x8xf32>
    %35 = tpu.matmul %34, %19, %cst_15 {dimension_numbers = #tpu.dot_dimension_numbers<[1], [0], [0], [1], [0, 0, 1, 1], [], []>} : vector<8x8xf32>, vector<8x8xf32>, vector<8x8xf32> -> vector<8x8xf32>
    %36 = vector.extract_strided_slice %1 {offsets = [0, 0], sizes = [8, 32], strides = [1, 1]} : vector<32x32xf32> to vector<8x32xf32>
    %cst_16 = arith.constant dense<0.000000e+00> : vector<8x32xf32>
    %37 = tpu.matmul %35, %36, %cst_16 {dimension_numbers = #tpu.dot_dimension_numbers<[1], [0], [0], [1], [0, 0, 1, 1], [], []>} : vector<8x8xf32>, vector<8x32xf32>, vector<8x32xf32> -> vector<8x32xf32>
    %38 = vector.extract_strided_slice %7 {offsets = [0, 8], sizes = [8, 8], strides = [1, 1]} : vector<16x32xf32> to vector<8x8xf32>
    %39 = vector.extract_strided_slice %8 {offsets = [0, 8], sizes = [8, 8], strides = [1, 1]} : vector<16x32xf32> to vector<8x8xf32>
    %40 = vector.extract_strided_slice %9 {offsets = [0, 8], sizes = [8, 8], strides = [1, 1]} : vector<16x32xf32> to vector<8x8xf32>
    %41 = tpu.transpose %39, [1, 0] : vector<8x8xf32> -> vector<8x8xf32>
    %cst_17 = arith.constant dense<0.000000e+00> : vector<8x8xf32>
    %42 = tpu.matmul %38, %41, %cst_17 {dimension_numbers = #tpu.dot_dimension_numbers<[1], [0], [0], [1], [0, 0, 1, 1], [], []>} : vector<8x8xf32>, vector<8x8xf32>, vector<8x8xf32> -> vector<8x8xf32>
    %cst_18 = arith.constant 0.353553385 : f32
    %43 = vector.broadcast %cst_18 : f32 to vector<8x8xf32>
    %44 = arith.mulf %42, %43 : vector<8x8xf32>
    %45 = arith.addf %44, %16 : vector<8x8xf32>
    %cst_19 = arith.constant dense<0xFF800000> : vector<8xf32>
    %46 = vector.multi_reduction <maximumf>, %45, %cst_19 [1] : vector<8x8xf32> to vector<8xf32>
    %47 = vector.shape_cast %46 : vector<8xf32> to vector<8x1xf32>
    %48 = vector.broadcast %47 : vector<8x1xf32> to vector<8x8xf32>
    %49 = arith.subf %45, %48 : vector<8x8xf32>
    %50 = math.exp %49 : vector<8x8xf32>
    %cst_20 = arith.constant dense<0.000000e+00> : vector<8xf32>
    %51 = vector.multi_reduction <add>, %50, %cst_20 [1] : vector<8x8xf32> to vector<8xf32>
    %52 = vector.shape_cast %51 : vector<8xf32> to vector<8x1xf32>
    %53 = tpu.reciprocal %52 {approx = true} : vector<8x1xf32> -> vector<8x1xf32>
    %54 = vector.broadcast %53 : vector<8x1xf32> to vector<8x8xf32>
    %55 = arith.mulf %50, %54 : vector<8x8xf32>
    %cst_21 = arith.constant dense<0.000000e+00> : vector<8x8xf32>
    %56 = tpu.matmul %55, %40, %cst_21 {dimension_numbers = #tpu.dot_dimension_numbers<[1], [0], [0], [1], [0, 0, 1, 1], [], []>} : vector<8x8xf32>, vector<8x8xf32>, vector<8x8xf32> -> vector<8x8xf32>
    %57 = vector.extract_strided_slice %1 {offsets = [8, 0], sizes = [8, 32], strides = [1, 1]} : vector<32x32xf32> to vector<8x32xf32>
    %cst_22 = arith.constant dense<0.000000e+00> : vector<8x32xf32>
    %58 = tpu.matmul %56, %57, %cst_22 {dimension_numbers = #tpu.dot_dimension_numbers<[1], [0], [0], [1], [0, 0, 1, 1], [], []>} : vector<8x8xf32>, vector<8x32xf32>, vector<8x32xf32> -> vector<8x32xf32>
    %59 = arith.addf %37, %58 : vector<8x32xf32>
    %60 = vector.extract_strided_slice %7 {offsets = [0, 16], sizes = [8, 8], strides = [1, 1]} : vector<16x32xf32> to vector<8x8xf32>
    %61 = vector.extract_strided_slice %8 {offsets = [0, 16], sizes = [8, 8], strides = [1, 1]} : vector<16x32xf32> to vector<8x8xf32>
    %62 = vector.extract_strided_slice %9 {offsets = [0, 16], sizes = [8, 8], strides = [1, 1]} : vector<16x32xf32> to vector<8x8xf32>
    %63 = tpu.transpose %61, [1, 0] : vector<8x8xf32> -> vector<8x8xf32>
    %cst_23 = arith.constant dense<0.000000e+00> : vector<8x8xf32>
    %64 = tpu.matmul %60, %63, %cst_23 {dimension_numbers = #tpu.dot_dimension_numbers<[1], [0], [0], [1], [0, 0, 1, 1], [], []>} : vector<8x8xf32>, vector<8x8xf32>, vector<8x8xf32> -> vector<8x8xf32>
    %cst_24 = arith.constant 0.353553385 : f32
    %65 = vector.broadcast %cst_24 : f32 to vector<8x8xf32>
    %66 = arith.mulf %64, %65 : vector<8x8xf32>
    %67 = arith.addf %66, %16 : vector<8x8xf32>
    %cst_25 = arith.constant dense<0xFF800000> : vector<8xf32>
    %68 = vector.multi_reduction <maximumf>, %67, %cst_25 [1] : vector<8x8xf32> to vector<8xf32>
    %69 = vector.shape_cast %68 : vector<8xf32> to vector<8x1xf32>
    %70 = vector.broadcast %69 : vector<8x1xf32> to vector<8x8xf32>
    %71 = arith.subf %67, %70 : vector<8x8xf32>
    %72 = math.exp %71 : vector<8x8xf32>
    %cst_26 = arith.constant dense<0.000000e+00> : vector<8xf32>
    %73 = vector.multi_reduction <add>, %72, %cst_26 [1] : vector<8x8xf32> to vector<8xf32>
    %74 = vector.shape_cast %73 : vector<8xf32> to vector<8x1xf32>
    %75 = tpu.reciprocal %74 {approx = true} : vector<8x1xf32> -> vector<8x1xf32>
    %76 = vector.broadcast %75 : vector<8x1xf32> to vector<8x8xf32>
    %77 = arith.mulf %72, %76 : vector<8x8xf32>
    %cst_27 = arith.constant dense<0.000000e+00> : vector<8x8xf32>
    %78 = tpu.matmul %77, %62, %cst_27 {dimension_numbers = #tpu.dot_dimension_numbers<[1], [0], [0], [1], [0, 0, 1, 1], [], []>} : vector<8x8xf32>, vector<8x8xf32>, vector<8x8xf32> -> vector<8x8xf32>
    %79 = vector.extract_strided_slice %1 {offsets = [16, 0], sizes = [8, 32], strides = [1, 1]} : vector<32x32xf32> to vector<8x32xf32>
    %cst_28 = arith.constant dense<0.000000e+00> : vector<8x32xf32>
    %80 = tpu.matmul %78, %79, %cst_28 {dimension_numbers = #tpu.dot_dimension_numbers<[1], [0], [0], [1], [0, 0, 1, 1], [], []>} : vector<8x8xf32>, vector<8x32xf32>, vector<8x32xf32> -> vector<8x32xf32>
    %81 = arith.addf %59, %80 : vector<8x32xf32>
    %82 = vector.extract_strided_slice %7 {offsets = [0, 24], sizes = [8, 8], strides = [1, 1]} : vector<16x32xf32> to vector<8x8xf32>
    %83 = vector.extract_strided_slice %8 {offsets = [0, 24], sizes = [8, 8], strides = [1, 1]} : vector<16x32xf32> to vector<8x8xf32>
    %84 = vector.extract_strided_slice %9 {offsets = [0, 24], sizes = [8, 8], strides = [1, 1]} : vector<16x32xf32> to vector<8x8xf32>
    %85 = tpu.transpose %83, [1, 0] : vector<8x8xf32> -> vector<8x8xf32>
    %cst_29 = arith.constant dense<0.000000e+00> : vector<8x8xf32>
    %86 = tpu.matmul %82, %85, %cst_29 {dimension_numbers = #tpu.dot_dimension_numbers<[1], [0], [0], [1], [0, 0, 1, 1], [], []>} : vector<8x8xf32>, vector<8x8xf32>, vector<8x8xf32> -> vector<8x8xf32>
    %cst_30 = arith.constant 0.353553385 : f32
    %87 = vector.broadcast %cst_30 : f32 to vector<8x8xf32>
    %88 = arith.mulf %86, %87 : vector<8x8xf32>
    %89 = arith.addf %88, %16 : vector<8x8xf32>
    %cst_31 = arith.constant dense<0xFF800000> : vector<8xf32>
    %90 = vector.multi_reduction <maximumf>, %89, %cst_31 [1] : vector<8x8xf32> to vector<8xf32>
    %91 = vector.shape_cast %90 : vector<8xf32> to vector<8x1xf32>
    %92 = vector.broadcast %91 : vector<8x1xf32> to vector<8x8xf32>
    %93 = arith.subf %89, %92 : vector<8x8xf32>
    %94 = math.exp %93 : vector<8x8xf32>
    %cst_32 = arith.constant dense<0.000000e+00> : vector<8xf32>
    %95 = vector.multi_reduction <add>, %94, %cst_32 [1] : vector<8x8xf32> to vector<8xf32>
    %96 = vector.shape_cast %95 : vector<8xf32> to vector<8x1xf32>
    %97 = tpu.reciprocal %96 {approx = true} : vector<8x1xf32> -> vector<8x1xf32>
    %98 = vector.broadcast %97 : vector<8x1xf32> to vector<8x8xf32>
    %99 = arith.mulf %94, %98 : vector<8x8xf32>
    %cst_33 = arith.constant dense<0.000000e+00> : vector<8x8xf32>
    %100 = tpu.matmul %99, %84, %cst_33 {dimension_numbers = #tpu.dot_dimension_numbers<[1], [0], [0], [1], [0, 0, 1, 1], [], []>} : vector<8x8xf32>, vector<8x8xf32>, vector<8x8xf32> -> vector<8x8xf32>
    %101 = vector.extract_strided_slice %1 {offsets = [24, 0], sizes = [8, 32], strides = [1, 1]} : vector<32x32xf32> to vector<8x32xf32>
    %cst_34 = arith.constant dense<0.000000e+00> : vector<8x32xf32>
    %102 = tpu.matmul %100, %101, %cst_34 {dimension_numbers = #tpu.dot_dimension_numbers<[1], [0], [0], [1], [0, 0, 1, 1], [], []>} : vector<8x8xf32>, vector<8x32xf32>, vector<8x32xf32> -> vector<8x32xf32>
    %103 = arith.addf %81, %102 : vector<8x32xf32>
    %104 = tpu.concatenate %34, %55, %77, %99 in 1 : vector<8x8xf32>, vector<8x8xf32>, vector<8x8xf32>, vector<8x8xf32> -> vector<8x32xf32>
    %105 = vector.extract_strided_slice %15 {offsets = [8, 0], sizes = [8, 8], strides = [1, 1]} : vector<16x8xf32> to vector<8x8xf32>
    %106 = vector.extract_strided_slice %7 {offsets = [8, 0], sizes = [8, 8], strides = [1, 1]} : vector<16x32xf32> to vector<8x8xf32>
    %107 = vector.extract_strided_slice %8 {offsets = [8, 0], sizes = [8, 8], strides = [1, 1]} : vector<16x32xf32> to vector<8x8xf32>
    %108 = vector.extract_strided_slice %9 {offsets = [8, 0], sizes = [8, 8], strides = [1, 1]} : vector<16x32xf32> to vector<8x8xf32>
    %109 = tpu.transpose %107, [1, 0] : vector<8x8xf32> -> vector<8x8xf32>
    %cst_35 = arith.constant dense<0.000000e+00> : vector<8x8xf32>
    %110 = tpu.matmul %106, %109, %cst_35 {dimension_numbers = #tpu.dot_dimension_numbers<[1], [0], [0], [1], [0, 0, 1, 1], [], []>} : vector<8x8xf32>, vector<8x8xf32>, vector<8x8xf32> -> vector<8x8xf32>
    %cst_36 = arith.constant 0.353553385 : f32
    %111 = vector.broadcast %cst_36 : f32 to vector<8x8xf32>
    %112 = arith.mulf %110, %111 : vector<8x8xf32>
    %113 = arith.addf %112, %105 : vector<8x8xf32>
    %cst_37 = arith.constant dense<0xFF800000> : vector<8xf32>
    %114 = vector.multi_reduction <maximumf>, %113, %cst_37 [1] : vector<8x8xf32> to vector<8xf32>
    %115 = vector.shape_cast %114 : vector<8xf32> to vector<8x1xf32>
    %116 = vector.broadcast %115 : vector<8x1xf32> to vector<8x8xf32>
    %117 = arith.subf %113, %116 : vector<8x8xf32>
    %118 = math.exp %117 : vector<8x8xf32>
    %cst_38 = arith.constant dense<0.000000e+00> : vector<8xf32>
    %119 = vector.multi_reduction <add>, %118, %cst_38 [1] : vector<8x8xf32> to vector<8xf32>
    %120 = vector.shape_cast %119 : vector<8xf32> to vector<8x1xf32>
    %121 = tpu.reciprocal %120 {approx = true} : vector<8x1xf32> -> vector<8x1xf32>
    %122 = vector.broadcast %121 : vector<8x1xf32> to vector<8x8xf32>
    %123 = arith.mulf %118, %122 : vector<8x8xf32>
    %cst_39 = arith.constant dense<0.000000e+00> : vector<8x8xf32>
    %124 = tpu.matmul %123, %108, %cst_39 {dimension_numbers = #tpu.dot_dimension_numbers<[1], [0], [0], [1], [0, 0, 1, 1], [], []>} : vector<8x8xf32>, vector<8x8xf32>, vector<8x8xf32> -> vector<8x8xf32>
    %125 = vector.extract_strided_slice %1 {offsets = [0, 0], sizes = [8, 32], strides = [1, 1]} : vector<32x32xf32> to vector<8x32xf32>
    %cst_40 = arith.constant dense<0.000000e+00> : vector<8x32xf32>
    %126 = tpu.matmul %124, %125, %cst_40 {dimension_numbers = #tpu.dot_dimension_numbers<[1], [0], [0], [1], [0, 0, 1, 1], [], []>} : vector<8x8xf32>, vector<8x32xf32>, vector<8x32xf32> -> vector<8x32xf32>
    %127 = vector.extract_strided_slice %7 {offsets = [8, 8], sizes = [8, 8], strides = [1, 1]} : vector<16x32xf32> to vector<8x8xf32>
    %128 = vector.extract_strided_slice %8 {offsets = [8, 8], sizes = [8, 8], strides = [1, 1]} : vector<16x32xf32> to vector<8x8xf32>
    %129 = vector.extract_strided_slice %9 {offsets = [8, 8], sizes = [8, 8], strides = [1, 1]} : vector<16x32xf32> to vector<8x8xf32>
    %130 = tpu.transpose %128, [1, 0] : vector<8x8xf32> -> vector<8x8xf32>
    %cst_41 = arith.constant dense<0.000000e+00> : vector<8x8xf32>
    %131 = tpu.matmul %127, %130, %cst_41 {dimension_numbers = #tpu.dot_dimension_numbers<[1], [0], [0], [1], [0, 0, 1, 1], [], []>} : vector<8x8xf32>, vector<8x8xf32>, vector<8x8xf32> -> vector<8x8xf32>
    %cst_42 = arith.constant 0.353553385 : f32
    %132 = vector.broadcast %cst_42 : f32 to vector<8x8xf32>
    %133 = arith.mulf %131, %132 : vector<8x8xf32>
    %134 = arith.addf %133, %105 : vector<8x8xf32>
    %cst_43 = arith.constant dense<0xFF800000> : vector<8xf32>
    %135 = vector.multi_reduction <maximumf>, %134, %cst_43 [1] : vector<8x8xf32> to vector<8xf32>
    %136 = vector.shape_cast %135 : vector<8xf32> to vector<8x1xf32>
    %137 = vector.broadcast %136 : vector<8x1xf32> to vector<8x8xf32>
    %138 = arith.subf %134, %137 : vector<8x8xf32>
    %139 = math.exp %138 : vector<8x8xf32>
    %cst_44 = arith.constant dense<0.000000e+00> : vector<8xf32>
    %140 = vector.multi_reduction <add>, %139, %cst_44 [1] : vector<8x8xf32> to vector<8xf32>
    %141 = vector.shape_cast %140 : vector<8xf32> to vector<8x1xf32>
    %142 = tpu.reciprocal %141 {approx = true} : vector<8x1xf32> -> vector<8x1xf32>
    %143 = vector.broadcast %142 : vector<8x1xf32> to vector<8x8xf32>
    %144 = arith.mulf %139, %143 : vector<8x8xf32>
    %cst_45 = arith.constant dense<0.000000e+00> : vector<8x8xf32>
    %145 = tpu.matmul %144, %129, %cst_45 {dimension_numbers = #tpu.dot_dimension_numbers<[1], [0], [0], [1], [0, 0, 1, 1], [], []>} : vector<8x8xf32>, vector<8x8xf32>, vector<8x8xf32> -> vector<8x8xf32>
    %146 = vector.extract_strided_slice %1 {offsets = [8, 0], sizes = [8, 32], strides = [1, 1]} : vector<32x32xf32> to vector<8x32xf32>
    %cst_46 = arith.constant dense<0.000000e+00> : vector<8x32xf32>
    %147 = tpu.matmul %145, %146, %cst_46 {dimension_numbers = #tpu.dot_dimension_numbers<[1], [0], [0], [1], [0, 0, 1, 1], [], []>} : vector<8x8xf32>, vector<8x32xf32>, vector<8x32xf32> -> vector<8x32xf32>
    %148 = arith.addf %126, %147 : vector<8x32xf32>
    %149 = vector.extract_strided_slice %7 {offsets = [8, 16], sizes = [8, 8], strides = [1, 1]} : vector<16x32xf32> to vector<8x8xf32>
    %150 = vector.extract_strided_slice %8 {offsets = [8, 16], sizes = [8, 8], strides = [1, 1]} : vector<16x32xf32> to vector<8x8xf32>
    %151 = vector.extract_strided_slice %9 {offsets = [8, 16], sizes = [8, 8], strides = [1, 1]} : vector<16x32xf32> to vector<8x8xf32>
    %152 = tpu.transpose %150, [1, 0] : vector<8x8xf32> -> vector<8x8xf32>
    %cst_47 = arith.constant dense<0.000000e+00> : vector<8x8xf32>
    %153 = tpu.matmul %149, %152, %cst_47 {dimension_numbers = #tpu.dot_dimension_numbers<[1], [0], [0], [1], [0, 0, 1, 1], [], []>} : vector<8x8xf32>, vector<8x8xf32>, vector<8x8xf32> -> vector<8x8xf32>
    %cst_48 = arith.constant 0.353553385 : f32
    %154 = vector.broadcast %cst_48 : f32 to vector<8x8xf32>
    %155 = arith.mulf %153, %154 : vector<8x8xf32>
    %156 = arith.addf %155, %105 : vector<8x8xf32>
    %cst_49 = arith.constant dense<0xFF800000> : vector<8xf32>
    %157 = vector.multi_reduction <maximumf>, %156, %cst_49 [1] : vector<8x8xf32> to vector<8xf32>
    %158 = vector.shape_cast %157 : vector<8xf32> to vector<8x1xf32>
    %159 = vector.broadcast %158 : vector<8x1xf32> to vector<8x8xf32>
    %160 = arith.subf %156, %159 : vector<8x8xf32>
    %161 = math.exp %160 : vector<8x8xf32>
    %cst_50 = arith.constant dense<0.000000e+00> : vector<8xf32>
    %162 = vector.multi_reduction <add>, %161, %cst_50 [1] : vector<8x8xf32> to vector<8xf32>
    %163 = vector.shape_cast %162 : vector<8xf32> to vector<8x1xf32>
    %164 = tpu.reciprocal %163 {approx = true} : vector<8x1xf32> -> vector<8x1xf32>
    %165 = vector.broadcast %164 : vector<8x1xf32> to vector<8x8xf32>
    %166 = arith.mulf %161, %165 : vector<8x8xf32>
    %cst_51 = arith.constant dense<0.000000e+00> : vector<8x8xf32>
    %167 = tpu.matmul %166, %151, %cst_51 {dimension_numbers = #tpu.dot_dimension_numbers<[1], [0], [0], [1], [0, 0, 1, 1], [], []>} : vector<8x8xf32>, vector<8x8xf32>, vector<8x8xf32> -> vector<8x8xf32>
    %168 = vector.extract_strided_slice %1 {offsets = [16, 0], sizes = [8, 32], strides = [1, 1]} : vector<32x32xf32> to vector<8x32xf32>
    %cst_52 = arith.constant dense<0.000000e+00> : vector<8x32xf32>
    %169 = tpu.matmul %167, %168, %cst_52 {dimension_numbers = #tpu.dot_dimension_numbers<[1], [0], [0], [1], [0, 0, 1, 1], [], []>} : vector<8x8xf32>, vector<8x32xf32>, vector<8x32xf32> -> vector<8x32xf32>
    %170 = arith.addf %148, %169 : vector<8x32xf32>
    %171 = vector.extract_strided_slice %7 {offsets = [8, 24], sizes = [8, 8], strides = [1, 1]} : vector<16x32xf32> to vector<8x8xf32>
    %172 = vector.extract_strided_slice %8 {offsets = [8, 24], sizes = [8, 8], strides = [1, 1]} : vector<16x32xf32> to vector<8x8xf32>
    %173 = vector.extract_strided_slice %9 {offsets = [8, 24], sizes = [8, 8], strides = [1, 1]} : vector<16x32xf32> to vector<8x8xf32>
    %174 = tpu.transpose %172, [1, 0] : vector<8x8xf32> -> vector<8x8xf32>
    %cst_53 = arith.constant dense<0.000000e+00> : vector<8x8xf32>
    %175 = tpu.matmul %171, %174, %cst_53 {dimension_numbers = #tpu.dot_dimension_numbers<[1], [0], [0], [1], [0, 0, 1, 1], [], []>} : vector<8x8xf32>, vector<8x8xf32>, vector<8x8xf32> -> vector<8x8xf32>
    %cst_54 = arith.constant 0.353553385 : f32
    %176 = vector.broadcast %cst_54 : f32 to vector<8x8xf32>
    %177 = arith.mulf %175, %176 : vector<8x8xf32>
    %178 = arith.addf %177, %105 : vector<8x8xf32>
    %cst_55 = arith.constant dense<0xFF800000> : vector<8xf32>
    %179 = vector.multi_reduction <maximumf>, %178, %cst_55 [1] : vector<8x8xf32> to vector<8xf32>
    %180 = vector.shape_cast %179 : vector<8xf32> to vector<8x1xf32>
    %181 = vector.broadcast %180 : vector<8x1xf32> to vector<8x8xf32>
    %182 = arith.subf %178, %181 : vector<8x8xf32>
    %183 = math.exp %182 : vector<8x8xf32>
    %cst_56 = arith.constant dense<0.000000e+00> : vector<8xf32>
    %184 = vector.multi_reduction <add>, %183, %cst_56 [1] : vector<8x8xf32> to vector<8xf32>
    %185 = vector.shape_cast %184 : vector<8xf32> to vector<8x1xf32>
    %186 = tpu.reciprocal %185 {approx = true} : vector<8x1xf32> -> vector<8x1xf32>
    %187 = vector.broadcast %186 : vector<8x1xf32> to vector<8x8xf32>
    %188 = arith.mulf %183, %187 : vector<8x8xf32>
    %cst_57 = arith.constant dense<0.000000e+00> : vector<8x8xf32>
    %189 = tpu.matmul %188, %173, %cst_57 {dimension_numbers = #tpu.dot_dimension_numbers<[1], [0], [0], [1], [0, 0, 1, 1], [], []>} : vector<8x8xf32>, vector<8x8xf32>, vector<8x8xf32> -> vector<8x8xf32>
    %190 = vector.extract_strided_slice %1 {offsets = [24, 0], sizes = [8, 32], strides = [1, 1]} : vector<32x32xf32> to vector<8x32xf32>
    %cst_58 = arith.constant dense<0.000000e+00> : vector<8x32xf32>
    %191 = tpu.matmul %189, %190, %cst_58 {dimension_numbers = #tpu.dot_dimension_numbers<[1], [0], [0], [1], [0, 0, 1, 1], [], []>} : vector<8x8xf32>, vector<8x32xf32>, vector<8x32xf32> -> vector<8x32xf32>
    %192 = arith.addf %170, %191 : vector<8x32xf32>
    %193 = tpu.concatenate %123, %144, %166, %188 in 1 : vector<8x8xf32>, vector<8x8xf32>, vector<8x8xf32>, vector<8x8xf32> -> vector<8x32xf32>
    %194 = tpu.concatenate %103, %192 in 0 : vector<8x32xf32>, vector<8x32xf32> -> vector<16x32xf32>
    %c0_59 = arith.constant 0 : index
    %c0_60 = arith.constant 0 : index
    %195 = vector.load %arg5[%c0_59, %c0_60] : memref<1x32xf32, #tpu.memory_space<vmem>>, vector<1x32xf32>
    %196 = vector.broadcast %195 : vector<1x32xf32> to vector<16x32xf32>
    %197 = arith.addf %194, %196 : vector<16x32xf32>
    %198 = arith.addf %0, %197 : vector<16x32xf32>
    %cst_61 = arith.constant dense<0.000000e+00> : vector<16xf32>
    %199 = vector.multi_reduction <add>, %198, %cst_61 [1] : vector<16x32xf32> to vector<16xf32>
    %200 = vector.shape_cast %199 : vector<16xf32> to vector<16x1xf32>
    %cst_62 = arith.constant 3.200000e+01 : f32
    %201 = vector.broadcast %cst_62 : f32 to vector<16x1xf32>
    %202 = arith.divf %200, %201 : vector<16x1xf32>
    %203 = vector.broadcast %202 : vector<16x1xf32> to vector<16x32xf32>
    %204 = arith.subf %198, %203 : vector<16x32xf32>
    %205 = arith.mulf %204, %204 : vector<16x32xf32>
    %cst_63 = arith.constant dense<0.000000e+00> : vector<16xf32>
    %206 = vector.multi_reduction <add>, %205, %cst_63 [1] : vector<16x32xf32> to vector<16xf32>
    %207 = vector.shape_cast %206 : vector<16xf32> to vector<16x1xf32>
    %cst_64 = arith.constant 3.200000e+01 : f32
    %208 = vector.broadcast %cst_64 : f32 to vector<16x1xf32>
    %209 = arith.divf %207, %208 : vector<16x1xf32>
    %cst_65 = arith.constant 9.99999997E-7 : f32
    %210 = vector.broadcast %cst_65 : f32 to vector<16x1xf32>
    %211 = arith.addf %209, %210 : vector<16x1xf32>
    %212 = math.rsqrt %211 : vector<16x1xf32>
    %213 = vector.broadcast %212 : vector<16x1xf32> to vector<16x32xf32>
    %214 = arith.mulf %204, %213 : vector<16x32xf32>
    %c0_66 = arith.constant 0 : index
    %c0_67 = arith.constant 0 : index
    %215 = vector.load %arg6[%c0_66, %c0_67] : memref<1x32xf32, #tpu.memory_space<vmem>>, vector<1x32xf32>
    %216 = vector.broadcast %215 : vector<1x32xf32> to vector<16x32xf32>
    %217 = arith.mulf %214, %216 : vector<16x32xf32>
    %c0_68 = arith.constant 0 : index
    %c0_69 = arith.constant 0 : index
    %218 = vector.load %arg7[%c0_68, %c0_69] : memref<1x32xf32, #tpu.memory_space<vmem>>, vector<1x32xf32>
    %219 = vector.broadcast %218 : vector<1x32xf32> to vector<16x32xf32>
    %220 = arith.addf %217, %219 : vector<16x32xf32>
    %c0_70 = arith.constant 0 : index
    %c0_71 = arith.constant 0 : index
    %221 = vector.load %arg8[%c0_70, %c0_71] : memref<16x32xf32, #tpu.memory_space<vmem>>, vector<16x32xf32>
    tpu.vector_store %arg8[%c0_70, %c0_71], %220 {strides = array<i32>} : memref<16x32xf32, #tpu.memory_space<vmem>>, vector<16x32xf32>,
    %222 = tpu.concatenate %104, %193 in 0 : vector<8x32xf32>, vector<8x32xf32> -> vector<16x32xf32>
    %c0_72 = arith.constant 0 : index
    %c0_73 = arith.constant 0 : index
    %223 = vector.load %arg9[%c0_72, %c0_73] : memref<16x32xf32, #tpu.memory_space<vmem>>, vector<16x32xf32>
    tpu.vector_store %arg9[%c0_72, %c0_73], %222 {strides = array<i32>} : memref<16x32xf32, #tpu.memory_space<vmem>>, vector<16x32xf32>,
    return
  }
}

</mosaic_0001>

<llo_original>
// kernel: tpu_custom_call.1
$region0: #{tpu_custom_call.1}
  #allocation0 [shape = 'u32[]', space=smem, size = 0x4, offset = 0x4, fixed_abs, tag = 'smem constant byte address 0x4 - core index']
  #allocation1 [shape = 'u32[72,128]{1,0:T(1,128)}', space=vmem, size = 0x9000, scoped, tag = 'internal scratch']
  %s0 = inlined_call_operand.vmem [shape: f32[16,32], index: 0, kind: input, shape index: {}]
  %s1 = inlined_call_operand.vmem [shape: s32[16,8], index: 1, kind: input, shape index: {}]
  %s2 = inlined_call_operand.hbm [shape: f32[32,96], index: 2, kind: input, shape index: {}]
  %s3 = inlined_call_operand.vmem [shape: f32[1,96], index: 3, kind: input, shape index: {}]
  %s4 = inlined_call_operand.hbm [shape: f32[32,32], index: 4, kind: input, shape index: {}]
  %s5 = inlined_call_operand.vmem [shape: f32[1,32], index: 5, kind: input, shape index: {}]
  %s6 = inlined_call_operand.vmem [shape: f32[1,32], index: 6, kind: input, shape index: {}]
  %s7 = inlined_call_operand.vmem [shape: f32[1,32], index: 7, kind: input, shape index: {}]
  %s8 = inlined_call_operand.hbm [shape: f32[16,32], index: 8, kind: output, shape index: {0}]
  %s9 = inlined_call_operand.hbm [shape: f32[16,32], index: 9, kind: output, shape index: {1}]
  %10 = xla_tuple %s8, %s9
  %s11 = sld [smem:[#allocation0]]
  $region58: #{tpu_custom_call.1} parent=0
    _
  %s13 = ssub.s32 1, %s11
  %s14 = scalar_select 0, %s13, %s11
  $region1: #{tpu_custom_call.1} parent=0
    #allocation2 [shape = 'u8[16384]{0}', space=vmem, size = 0x4000, scoped, tag = 'input window, operand 2, single buffered']
    #allocation3 [shape = 's32[1]{0}', space=sflag, size = 0x4, scoped, tag = 'scoped memory for tpu_custom_call.1']
    #allocation4 [shape = 's32[1]{0}', space=sflag, size = 0x4, scoped, tag = 'scoped memory for tpu_custom_call.1']
    #allocation5 [shape = 'u8[16384]{0}', space=vmem, size = 0x4000, scoped, tag = 'input window, operand 4, single buffered']
    #allocation6 [shape = 's32[1]{0}', space=sflag, size = 0x4, scoped, tag = 'scoped memory for tpu_custom_call.1']
    #allocation7 [shape = 'u8[8192]{0}', space=vmem, size = 0x2000, scoped, tag = 'output window, operand 0, single buffered']
    #allocation8 [shape = 'u8[8192]{0}', space=vmem, size = 0x2000, scoped, tag = 'output window, operand 1, single buffered']
    #allocation9 [shape = 's32[1]{0}', space=sflag, size = 0x4, scoped, tag = 'scoped memory for tpu_custom_call.1']
    %15 = vsyncpa [#allocation3], 0
    %16 = vsyncpa [#allocation6], 0
    %17 = vsyncpa [#allocation4], 0
    %18 = vsyncpa [#allocation9], 0
    // Predicated region
    $region2: #{tpu_custom_call.1} parent=1 // pred_check
      _
    $region3: #{tpu_custom_call.1} parent=1 // pred_check_branch
      %20 = sbr.rel (0) target = $region5
    $region4: #{tpu_custom_call.1} parent=1 // pred_region
      _
    $region5: #{tpu_custom_call.1} parent=1 // pred_fallthru
      _
    // Predicated region
    $region6: #{tpu_custom_call.1} parent=1 // pred_check
      _
    $region7: #{tpu_custom_call.1} parent=1 // pred_check_branch
      %22 = sbr.rel (0) target = $region9
    $region8: #{tpu_custom_call.1} parent=1 // pred_region
      _
    $region9: #{tpu_custom_call.1} parent=1 // pred_fallthru
      _
    // Predicated region
    $region10: #{tpu_custom_call.1} parent=1 // pred_check
      _
    $region11: #{tpu_custom_call.1} parent=1 // pred_check_branch
      %24 = sbr.rel (0) target = $region13
    $region12: #{tpu_custom_call.1} parent=1 // pred_region
      %26 = vsyncadd [#allocation3], 0
      %s27 = sshll.u32 %s2, 4
      %s28 = int_to_ptr.hbm [resolvable:$true] %s27
      %s29 = sshll.u32 [#allocation2], 4
      %s30 = int_to_ptr.vmem [resolvable:$true] %s29
      %35 = dma.hbm_to_vmem [thread:$0]  %s28, 512, %s30, [#allocation3], 128, 128, 8
    $region13: #{tpu_custom_call.1} parent=1 // pred_fallthru
      _
    // Predicated region
    $region14: #{tpu_custom_call.1} parent=1 // pred_check
      _
    $region15: #{tpu_custom_call.1} parent=1 // pred_check_branch
      %37 = sbr.rel (0) target = $region17
    $region16: #{tpu_custom_call.1} parent=1 // pred_region
      _
    $region17: #{tpu_custom_call.1} parent=1 // pred_fallthru
      _
    // Predicated region
    $region18: #{tpu_custom_call.1} parent=1 // pred_check
      _
    $region19: #{tpu_custom_call.1} parent=1 // pred_check_branch
      %39 = sbr.rel (0) target = $region21
    $region20: #{tpu_custom_call.1} parent=1 // pred_region
      %41 = vsyncadd [#allocation6], 0
      %s42 = sshll.u32 %s4, 4
      %s43 = int_to_ptr.hbm [resolvable:$true] %s42
      %s44 = sshll.u32 [#allocation5], 4
      %s45 = int_to_ptr.vmem [resolvable:$true] %s44
      %50 = dma.hbm_to_vmem [thread:$0]  %s43, 512, %s45, [#allocation6], 128, 128, 8
    $region21: #{tpu_custom_call.1} parent=1 // pred_fallthru
      _
    // Predicated region
    $region22: #{tpu_custom_call.1} parent=1 // pred_check
      _
    $region23: #{tpu_custom_call.1} parent=1 // pred_check_branch
      %52 = sbr.rel (0) target = $region25
    $region24: #{tpu_custom_call.1} parent=1 // pred_region
      _
    $region25: #{tpu_custom_call.1} parent=1 // pred_fallthru
      _
    // Predicated region
    $region26: #{tpu_custom_call.1} parent=1 // pred_check
      _
    $region27: #{tpu_custom_call.1} parent=1 // pred_check_branch
      %54 = sbr.rel (0) target = $region29
    $region28: #{tpu_custom_call.1} parent=1 // pred_region
      _
    $region29: #{tpu_custom_call.1} parent=1 // pred_fallthru
      _
    // Predicated region
    $region30: #{tpu_custom_call.1} parent=1 // pred_check
      _
    $region31: #{tpu_custom_call.1} parent=1 // pred_check_branch
      %56 = sbr.rel (0) target = $region33
    $region32: #{tpu_custom_call.1} parent=1 // pred_region
      _
    $region33: #{tpu_custom_call.1} parent=1 // pred_fallthru
      _
    // Predicated region
    $region34: #{tpu_custom_call.1} parent=1 // pred_check
      _
    $region35: #{tpu_custom_call.1} parent=1 // pred_check_branch
      %58 = sbr.rel (0) target = $region37
    $region36: #{tpu_custom_call.1} parent=1 // pred_region
      %60 = dma.done [#allocation3], 512
    $region37: #{tpu_custom_call.1} parent=1 // pred_fallthru
      _
    // Predicated region
    $region38: #{tpu_custom_call.1} parent=1 // pred_check
      _
    $region39: #{tpu_custom_call.1} parent=1 // pred_check_branch
      %62 = sbr.rel (0) target = $region41
    $region40: #{tpu_custom_call.1} parent=1 // pred_region
      %64 = dma.done [#allocation6], 512
    $region41: #{tpu_custom_call.1} parent=1 // pred_fallthru
      _
    %v65 = vld [vmem:[%s0] sm:$0xff]
    %v66 = vld [vmem:[%s0 + $0x8] sm:$0xff]
    %v67 = vld [vmem:[#allocation5] sm:$0xff]
    %v68 = vld [vmem:[#allocation5 + $0x8] sm:$0xff]
    %v69 = vld [vmem:[#allocation5 + $0x10] sm:$0xff]
    %v70 = vld [vmem:[#allocation5 + $0x18] sm:$0xff]
    %v71 = vld [vmem:[#allocation2] sm:$0xff]
    %v72 = vld [vmem:[#allocation2 + $0x8] sm:$0xff]
    %v73 = vld [vmem:[#allocation2 + $0x10] sm:$0xff]
    %v74 = vld [vmem:[#allocation2 + $0x18] sm:$0xff]
    %v75 = vld [vmem:[%s3] sm:$0x1]
    %v77 = vperm.slane %v75, 0
    %vm79 = vcmask 261120
    %v81 = vsel %vm79, %v65, 0
    %v84 = vsel %vm79, %v66, 0
    %86 = vmatpush.msra.mxu0 0.0
    %87 = vmatpush.msra.mxu0 0.0
    %88 = vmatpush.msra.mxu0 0.0
    %89 = vmatpush.msra.mxu0 0.0
    %90 = vmatpush.msra.mxu0 0.0
    %91 = vmatpush.msra.mxu0 0.0
    %92 = vmatpush.msra.mxu0 0.0
    %93 = vmatpush.msra.mxu0 0.0
    %94 = vmatpush.msra.mxu0 0.0
    %95 = vmatpush.msra.mxu0 0.0
    %96 = vmatpush.msra.mxu0 0.0
    %97 = vmatpush.msra.mxu0 0.0
    %98 = vmatpush.msra.mxu0 %v74
    %99 = vmatpush.msra.mxu0 %v73
    %100 = vmatpush.msra.mxu0 %v72
    %101 = vmatpush.msra.mxu0 %v71
    %102 = vmatmul.f32.gmra.mxu0 %v81
    %v103 = vpop.f32.mrf.mxu0
    %v104 = vadd.f32 %v77, %v103
    %105 = vmatmul.f32.gmra.mxu0 %v84
    %v106 = vpop.f32.mrf.mxu0
    %v107 = vadd.f32 %v77, %v106
    %108 = vdwg.mxu0
    %v109 = vld [vmem:[%s1] sm:$0xff]
    %v110 = vld [vmem:[%s1 + $0x8] sm:$0xff]
    %vm111 = vcmp.gt.s32.totalorder %v109, 0
    %vm112 = vcmp.gt.s32.totalorder %v110, 0
    %v113 = vsel %vm111, -1e+09, 0.0
    %v114 = vsel %vm112, -1e+09, 0.0
    %116 = vrot.lane.b32.xlu0 %v104, 96
    %v117 = vpop.permute.xlu0 %116
    %vm118 = vcmask 64512
    %v119 = vsel %vm118, %v104, 0
    %v121 = vsel %vm118, %v117, 0
    %123 = vmatpush.xpose.msra.mxu0 0.0
    %124 = vmatpush.xpose.msra.mxu0 0.0
    %125 = vmatpush.xpose.msra.mxu0 0.0
    %126 = vmatpush.xpose.msra.mxu0 0.0
    %127 = vmatpush.xpose.msra.mxu0 0.0
    %128 = vmatpush.xpose.msra.mxu0 0.0
    %129 = vmatpush.xpose.msra.mxu0 0.0
    %130 = vmatpush.xpose.msra.mxu0 0.0
    %131 = vmatpush.xpose.msra.mxu0 0.0
    %132 = vmatpush.xpose.msra.mxu0 0.0
    %133 = vmatpush.xpose.msra.mxu0 0.0
    %134 = vmatpush.xpose.msra.mxu0 0.0
    %135 = vmatpush.xpose.msra.mxu0 0.0
    %136 = vmatpush.xpose.msra.mxu0 0.0
    %137 = vmatpush.xpose.msra.mxu0 0.0
    %138 = vmatpush.xpose.msra.mxu0 %v121
    %139 = vmatmul.f32.gmra.mxu0 %v119
    %v140 = vpop.f32.mrf.mxu0
    %v141 = vadd.f32 0.0, %v140
    %142 = vdwg.mxu0
    %v143 = vmul.f32 %v141, 0.35355338
    %v144 = vadd.f32 %v143, %v113
    %v145 = vsel %vm118, %v144, -inf
    %146 = vmax.xlane.f32.xlu0 %v145
    %v147 = vpop.xlane.xlu0 %146
    %v148 = vsub.f32 %v144, %v147
    %v149 = vmul.f32 %v148, 1.442695
    %v150 = vpow.pop %v149
    %v151 = vsel %vm118, %v150, 0.0
    %152 = vadd.xlane.f32.xlu0 %v151
    %v153 = vpop.xlane.xlu0 %152
    %v154 = vrcp.pop %v153
    %v155 = vmul.f32 %v150, %v154
    %156 = vrot.lane.b32.xlu0 %v104, 64
    %v157 = vpop.permute.xlu0 %156
    %v160 = vsel %vm118, %v155, 0
    %162 = vmatpush.msra.mxu0 0.0
    %163 = vmatpush.msra.mxu0 0.0
    %164 = vmatpush.msra.mxu0 0.0
    %165 = vmatpush.msra.mxu0 0.0
    %166 = vmatpush.msra.mxu0 0.0
    %167 = vmatpush.msra.mxu0 0.0
    %168 = vmatpush.msra.mxu0 0.0
    %169 = vmatpush.msra.mxu0 0.0
    %170 = vmatpush.msra.mxu0 0.0
    %171 = vmatpush.msra.mxu0 0.0
    %172 = vmatpush.msra.mxu0 0.0
    %173 = vmatpush.msra.mxu0 0.0
    %174 = vmatpush.msra.mxu0 0.0
    %175 = vmatpush.msra.mxu0 0.0
    %176 = vmatpush.msra.mxu0 0.0
    %177 = vmatpush.msra.mxu0 %v157
    %178 = vmatmul.f32.gmra.mxu0 %v160
    %v179 = vpop.f32.mrf.mxu0
    %v180 = vadd.f32 0.0, %v179
    %181 = vdwg.mxu0
    %182 = vrot.lane.b32.xlu0 %v104, 120
    %v183 = vpop.permute.xlu0 %182
    %184 = vrot.lane.b32.xlu0 %v104, 88
    %v185 = vpop.permute.xlu0 %184
    %v186 = vsel %vm118, %v183, 0
    %v188 = vsel %vm118, %v185, 0
    %190 = vmatpush.xpose.msra.mxu0 0.0
    %191 = vmatpush.xpose.msra.mxu0 0.0
    %192 = vmatpush.xpose.msra.mxu0 0.0
    %193 = vmatpush.xpose.msra.mxu0 0.0
    %194 = vmatpush.xpose.msra.mxu0 0.0
    %195 = vmatpush.xpose.msra.mxu0 0.0
    %196 = vmatpush.xpose.msra.mxu0 0.0
    %197 = vmatpush.xpose.msra.mxu0 0.0
    %198 = vmatpush.xpose.msra.mxu0 0.0
    %199 = vmatpush.xpose.msra.mxu0 0.0
    %200 = vmatpush.xpose.msra.mxu0 0.0
    %201 = vmatpush.xpose.msra.mxu0 0.0
    %202 = vmatpush.xpose.msra.mxu0 0.0
    %203 = vmatpush.xpose.msra.mxu0 0.0
    %204 = vmatpush.xpose.msra.mxu0 0.0
    %205 = vmatpush.xpose.msra.mxu0 %v188
    %206 = vmatmul.f32.gmra.mxu0 %v186
    %v207 = vpop.f32.mrf.mxu0
    %v208 = vadd.f32 0.0, %v207
    %209 = vdwg.mxu0
    %v210 = vmul.f32 %v208, 0.35355338
    %v211 = vadd.f32 %v210, %v113
    %v212 = vsel %vm118, %v211, -inf
    %213 = vmax.xlane.f32.xlu0 %v212
    %v214 = vpop.xlane.xlu0 %213
    %v215 = vsub.f32 %v211, %v214
    %v216 = vmul.f32 %v215, 1.442695
    %v217 = vpow.pop %v216
    %v218 = vsel %vm118, %v217, 0.0
    %219 = vadd.xlane.f32.xlu0 %v218
    %v220 = vpop.xlane.xlu0 %219
    %v221 = vrcp.pop %v220
    %v222 = vmul.f32 %v217, %v221
    %223 = vrot.lane.b32.xlu0 %v104, 56
    %v224 = vpop.permute.xlu0 %223
    %v227 = vsel %vm118, %v222, 0
    %229 = vmatpush.msra.mxu0 0.0
    %230 = vmatpush.msra.mxu0 0.0
    %231 = vmatpush.msra.mxu0 0.0
    %232 = vmatpush.msra.mxu0 0.0
    %233 = vmatpush.msra.mxu0 0.0
    %234 = vmatpush.msra.mxu0 0.0
    %235 = vmatpush.msra.mxu0 0.0
    %236 = vmatpush.msra.mxu0 0.0
    %237 = vmatpush.msra.mxu0 0.0
    %238 = vmatpush.msra.mxu0 0.0
    %239 = vmatpush.msra.mxu0 0.0
    %240 = vmatpush.msra.mxu0 0.0
    %241 = vmatpush.msra.mxu0 0.0
    %242 = vmatpush.msra.mxu0 0.0
    %243 = vmatpush.msra.mxu0 0.0
    %244 = vmatpush.msra.mxu0 %v224
    %245 = vmatmul.f32.gmra.mxu0 %v227
    %v246 = vpop.f32.mrf.mxu0
    %v247 = vadd.f32 0.0, %v246
    %248 = vdwg.mxu0
    %v250 = vsel %vm118, %v247, 0
    %252 = vmatpush.msra.mxu0 0.0
    %253 = vmatpush.msra.mxu0 0.0
    %254 = vmatpush.msra.mxu0 0.0
    %255 = vmatpush.msra.mxu0 0.0
    %256 = vmatpush.msra.mxu0 0.0
    %257 = vmatpush.msra.mxu0 0.0
    %258 = vmatpush.msra.mxu0 0.0
    %259 = vmatpush.msra.mxu0 0.0
    %260 = vmatpush.msra.mxu0 0.0
    %261 = vmatpush.msra.mxu0 0.0
    %262 = vmatpush.msra.mxu0 0.0
    %263 = vmatpush.msra.mxu0 0.0
    %264 = vmatpush.msra.mxu0 0.0
    %265 = vmatpush.msra.mxu0 0.0
    %266 = vmatpush.msra.mxu0 0.0
    %267 = vmatpush.msra.mxu0 %v68
    %268 = vmatmul.f32.gmra.mxu0 %v250
    %v269 = vpop.f32.mrf.mxu0
    %v270 = vadd.f32 0.0, %v269
    %271 = vdwg.mxu0
    %v273 = vsel %vm118, %v180, 0
    %275 = vmatpush.msra.mxu0 0.0
    %276 = vmatpush.msra.mxu0 0.0
    %277 = vmatpush.msra.mxu0 0.0
    %278 = vmatpush.msra.mxu0 0.0
    %279 = vmatpush.msra.mxu0 0.0
    %280 = vmatpush.msra.mxu0 0.0
    %281 = vmatpush.msra.mxu0 0.0
    %282 = vmatpush.msra.mxu0 0.0
    %283 = vmatpush.msra.mxu0 0.0
    %284 = vmatpush.msra.mxu0 0.0
    %285 = vmatpush.msra.mxu0 0.0
    %286 = vmatpush.msra.mxu0 0.0
    %287 = vmatpush.msra.mxu0 0.0
    %288 = vmatpush.msra.mxu0 0.0
    %289 = vmatpush.msra.mxu0 0.0
    %290 = vmatpush.msra.mxu0 %v67
    %291 = vmatmul.f32.gmra.mxu0 %v273
    %v292 = vpop.f32.mrf.mxu0
    %v293 = vadd.f32 %v270, %v292
    %294 = vdwg.mxu0
    %295 = vrot.lane.b32.xlu0 %v104, 112
    %v296 = vpop.permute.xlu0 %295
    %297 = vrot.lane.b32.xlu0 %v104, 80
    %v298 = vpop.permute.xlu0 %297
    %v299 = vsel %vm118, %v296, 0
    %v301 = vsel %vm118, %v298, 0
    %303 = vmatpush.xpose.msra.mxu0 0.0
    %304 = vmatpush.xpose.msra.mxu0 0.0
    %305 = vmatpush.xpose.msra.mxu0 0.0
    %306 = vmatpush.xpose.msra.mxu0 0.0
    %307 = vmatpush.xpose.msra.mxu0 0.0
    %308 = vmatpush.xpose.msra.mxu0 0.0
    %309 = vmatpush.xpose.msra.mxu0 0.0
    %310 = vmatpush.xpose.msra.mxu0 0.0
    %311 = vmatpush.xpose.msra.mxu0 0.0
    %312 = vmatpush.xpose.msra.mxu0 0.0
    %313 = vmatpush.xpose.msra.mxu0 0.0
    %314 = vmatpush.xpose.msra.mxu0 0.0
    %315 = vmatpush.xpose.msra.mxu0 0.0
    %316 = vmatpush.xpose.msra.mxu0 0.0
    %317 = vmatpush.xpose.msra.mxu0 0.0
    %318 = vmatpush.xpose.msra.mxu0 %v301
    %319 = vmatmul.f32.gmra.mxu0 %v299
    %v320 = vpop.f32.mrf.mxu0
    %v321 = vadd.f32 0.0, %v320
    %322 = vdwg.mxu0
    %v323 = vmul.f32 %v321, 0.35355338
    %v324 = vadd.f32 %v323, %v113
    %v325 = vsel %vm118, %v324, -inf
    %326 = vmax.xlane.f32.xlu0 %v325
    %v327 = vpop.xlane.xlu0 %326
    %v328 = vsub.f32 %v324, %v327
    %v329 = vmul.f32 %v328, 1.442695
    %v330 = vpow.pop %v329
    %v331 = vsel %vm118, %v330, 0.0
    %332 = vadd.xlane.f32.xlu0 %v331
    %v333 = vpop.xlane.xlu0 %332
    %v334 = vrcp.pop %v333
    %v335 = vmul.f32 %v330, %v334
    %336 = vrot.lane.b32.xlu0 %v104, 48
    %v337 = vpop.permute.xlu0 %336
    %v340 = vsel %vm118, %v335, 0
    %342 = vmatpush.msra.mxu0 0.0
    %343 = vmatpush.msra.mxu0 0.0
    %344 = vmatpush.msra.mxu0 0.0
    %345 = vmatpush.msra.mxu0 0.0
    %346 = vmatpush.msra.mxu0 0.0
    %347 = vmatpush.msra.mxu0 0.0
    %348 = vmatpush.msra.mxu0 0.0
    %349 = vmatpush.msra.mxu0 0.0
    %350 = vmatpush.msra.mxu0 0.0
    %351 = vmatpush.msra.mxu0 0.0
    %352 = vmatpush.msra.mxu0 0.0
    %353 = vmatpush.msra.mxu0 0.0
    %354 = vmatpush.msra.mxu0 0.0
    %355 = vmatpush.msra.mxu0 0.0
    %356 = vmatpush.msra.mxu0 0.0
    %357 = vmatpush.msra.mxu0 %v337
    %358 = vmatmul.f32.gmra.mxu0 %v340
    %v359 = vpop.f32.mrf.mxu0
    %v360 = vadd.f32 0.0, %v359
    %361 = vdwg.mxu0
    %v363 = vsel %vm118, %v360, 0
    %365 = vmatpush.msra.mxu0 0.0
    %366 = vmatpush.msra.mxu0 0.0
    %367 = vmatpush.msra.mxu0 0.0
    %368 = vmatpush.msra.mxu0 0.0
    %369 = vmatpush.msra.mxu0 0.0
    %370 = vmatpush.msra.mxu0 0.0
    %371 = vmatpush.msra.mxu0 0.0
    %372 = vmatpush.msra.mxu0 0.0
    %373 = vmatpush.msra.mxu0 0.0
    %374 = vmatpush.msra.mxu0 0.0
    %375 = vmatpush.msra.mxu0 0.0
    %376 = vmatpush.msra.mxu0 0.0
    %377 = vmatpush.msra.mxu0 0.0
    %378 = vmatpush.msra.mxu0 0.0
    %379 = vmatpush.msra.mxu0 0.0
    %380 = vmatpush.msra.mxu0 %v69
    %381 = vmatmul.f32.gmra.mxu0 %v363
    %v382 = vpop.f32.mrf.mxu0
    %v383 = vadd.f32 0.0, %v382
    %384 = vdwg.mxu0
    %v385 = vadd.f32 %v293, %v383
    %386 = vrot.lane.b32.xlu0 %v104, 104
    %v387 = vpop.permute.xlu0 %386
    %388 = vrot.lane.b32.xlu0 %v104, 72
    %v389 = vpop.permute.xlu0 %388
    %v390 = vsel %vm118, %v387, 0
    %v392 = vsel %vm118, %v389, 0
    %394 = vmatpush.xpose.msra.mxu0 0.0
    %395 = vmatpush.xpose.msra.mxu0 0.0
    %396 = vmatpush.xpose.msra.mxu0 0.0
    %397 = vmatpush.xpose.msra.mxu0 0.0
    %398 = vmatpush.xpose.msra.mxu0 0.0
    %399 = vmatpush.xpose.msra.mxu0 0.0
    %400 = vmatpush.xpose.msra.mxu0 0.0
    %401 = vmatpush.xpose.msra.mxu0 0.0
    %402 = vmatpush.xpose.msra.mxu0 0.0
    %403 = vmatpush.xpose.msra.mxu0 0.0
    %404 = vmatpush.xpose.msra.mxu0 0.0
    %405 = vmatpush.xpose.msra.mxu0 0.0
    %406 = vmatpush.xpose.msra.mxu0 0.0
    %407 = vmatpush.xpose.msra.mxu0 0.0
    %408 = vmatpush.xpose.msra.mxu0 0.0
    %409 = vmatpush.xpose.msra.mxu0 %v392
    %410 = vmatmul.f32.gmra.mxu0 %v390
    %v411 = vpop.f32.mrf.mxu0
    %v412 = vadd.f32 0.0, %v411
    %413 = vdwg.mxu0
    %v414 = vmul.f32 %v412, 0.35355338
    %v415 = vadd.f32 %v414, %v113
    %v416 = vsel %vm118, %v415, -inf
    %417 = vmax.xlane.f32.xlu0 %v416
    %v418 = vpop.xlane.xlu0 %417
    %v419 = vsub.f32 %v415, %v418
    %v420 = vmul.f32 %v419, 1.442695
    %v421 = vpow.pop %v420
    %v422 = vsel %vm118, %v421, 0.0
    %423 = vadd.xlane.f32.xlu0 %v422
    %v424 = vpop.xlane.xlu0 %423
    %v425 = vrcp.pop %v424
    %v426 = vmul.f32 %v421, %v425
    %427 = vrot.lane.b32.xlu0 %v104, 40
    %v428 = vpop.permute.xlu0 %427
    %v431 = vsel %vm118, %v426, 0
    %433 = vmatpush.msra.mxu0 0.0
    %434 = vmatpush.msra.mxu0 0.0
    %435 = vmatpush.msra.mxu0 0.0
    %436 = vmatpush.msra.mxu0 0.0
    %437 = vmatpush.msra.mxu0 0.0
    %438 = vmatpush.msra.mxu0 0.0
    %439 = vmatpush.msra.mxu0 0.0
    %440 = vmatpush.msra.mxu0 0.0
    %441 = vmatpush.msra.mxu0 0.0
    %442 = vmatpush.msra.mxu0 0.0
    %443 = vmatpush.msra.mxu0 0.0
    %444 = vmatpush.msra.mxu0 0.0
    %445 = vmatpush.msra.mxu0 0.0
    %446 = vmatpush.msra.mxu0 0.0
    %447 = vmatpush.msra.mxu0 0.0
    %448 = vmatpush.msra.mxu0 %v428
    %449 = vmatmul.f32.gmra.mxu0 %v431
    %v450 = vpop.f32.mrf.mxu0
    %v451 = vadd.f32 0.0, %v450
    %452 = vdwg.mxu0
    %v454 = vsel %vm118, %v451, 0
    %456 = vmatpush.msra.mxu0 0.0
    %457 = vmatpush.msra.mxu0 0.0
    %458 = vmatpush.msra.mxu0 0.0
    %459 = vmatpush.msra.mxu0 0.0
    %460 = vmatpush.msra.mxu0 0.0
    %461 = vmatpush.msra.mxu0 0.0
    %462 = vmatpush.msra.mxu0 0.0
    %463 = vmatpush.msra.mxu0 0.0
    %464 = vmatpush.msra.mxu0 0.0
    %465 = vmatpush.msra.mxu0 0.0
    %466 = vmatpush.msra.mxu0 0.0
    %467 = vmatpush.msra.mxu0 0.0
    %468 = vmatpush.msra.mxu0 0.0
    %469 = vmatpush.msra.mxu0 0.0
    %470 = vmatpush.msra.mxu0 0.0
    %471 = vmatpush.msra.mxu0 %v70
    %472 = vmatmul.f32.gmra.mxu0 %v454
    %v473 = vpop.f32.mrf.mxu0
    %v474 = vadd.f32 0.0, %v473
    %475 = vdwg.mxu0
    %v476 = vadd.f32 %v385, %v474
    %477 = vrot.lane.b32.xlu0 %v222, 8
    %v478 = vpop.permute.xlu0 %477
    %480 = vrot.lane.b32.xlu0 %v335, 16
    %v481 = vpop.permute.xlu0 %480
    %483 = vrot.lane.b32.xlu0 %v426, 24
    %v484 = vpop.permute.xlu0 %483
    %v486 = vsel %vm118, %v155, %v478
    %vm487 = vcmask 130048
    %v488 = vsel %vm487, %v486, %v481
    %vm489 = vcmask 195584
    %v490 = vsel %vm489, %v488, %v484
    %492 = vrot.lane.b32.xlu0 %v107, 96
    %v493 = vpop.permute.xlu0 %492
    %v494 = vsel %vm118, %v107, 0
    %v496 = vsel %vm118, %v493, 0
    %498 = vmatpush.xpose.msra.mxu0 0.0
    %499 = vmatpush.xpose.msra.mxu0 0.0
    %500 = vmatpush.xpose.msra.mxu0 0.0
    %501 = vmatpush.xpose.msra.mxu0 0.0
    %502 = vmatpush.xpose.msra.mxu0 0.0
    %503 = vmatpush.xpose.msra.mxu0 0.0
    %504 = vmatpush.xpose.msra.mxu0 0.0
    %505 = vmatpush.xpose.msra.mxu0 0.0
    %506 = vmatpush.xpose.msra.mxu0 0.0
    %507 = vmatpush.xpose.msra.mxu0 0.0
    %508 = vmatpush.xpose.msra.mxu0 0.0
    %509 = vmatpush.xpose.msra.mxu0 0.0
    %510 = vmatpush.xpose.msra.mxu0 0.0
    %511 = vmatpush.xpose.msra.mxu0 0.0
    %512 = vmatpush.xpose.msra.mxu0 0.0
    %513 = vmatpush.xpose.msra.mxu0 %v496
    %514 = vmatmul.f32.gmra.mxu0 %v494
    %v515 = vpop.f32.mrf.mxu0
    %v516 = vadd.f32 0.0, %v515
    %517 = vdwg.mxu0
    %v518 = vmul.f32 %v516, 0.35355338
    %v519 = vadd.f32 %v518, %v114
    %v520 = vsel %vm118, %v519, -inf
    %521 = vmax.xlane.f32.xlu0 %v520
    %v522 = vpop.xlane.xlu0 %521
    %v523 = vsub.f32 %v519, %v522
    %v524 = vmul.f32 %v523, 1.442695
    %v525 = vpow.pop %v524
    %v526 = vsel %vm118, %v525, 0.0
    %527 = vadd.xlane.f32.xlu0 %v526
    %v528 = vpop.xlane.xlu0 %527
    %v529 = vrcp.pop %v528
    %v530 = vmul.f32 %v525, %v529
    %531 = vrot.lane.b32.xlu0 %v107, 64
    %v532 = vpop.permute.xlu0 %531
    %v535 = vsel %vm118, %v530, 0
    %537 = vmatpush.msra.mxu0 0.0
    %538 = vmatpush.msra.mxu0 0.0
    %539 = vmatpush.msra.mxu0 0.0
    %540 = vmatpush.msra.mxu0 0.0
    %541 = vmatpush.msra.mxu0 0.0
    %542 = vmatpush.msra.mxu0 0.0
    %543 = vmatpush.msra.mxu0 0.0
    %544 = vmatpush.msra.mxu0 0.0
    %545 = vmatpush.msra.mxu0 0.0
    %546 = vmatpush.msra.mxu0 0.0
    %547 = vmatpush.msra.mxu0 0.0
    %548 = vmatpush.msra.mxu0 0.0
    %549 = vmatpush.msra.mxu0 0.0
    %550 = vmatpush.msra.mxu0 0.0
    %551 = vmatpush.msra.mxu0 0.0
    %552 = vmatpush.msra.mxu0 %v532
    %553 = vmatmul.f32.gmra.mxu0 %v535
    %v554 = vpop.f32.mrf.mxu0
    %v555 = vadd.f32 0.0, %v554
    %556 = vdwg.mxu0
    %557 = vrot.lane.b32.xlu0 %v107, 120
    %v558 = vpop.permute.xlu0 %557
    %559 = vrot.lane.b32.xlu0 %v107, 88
    %v560 = vpop.permute.xlu0 %559
    %v561 = vsel %vm118, %v558, 0
    %v563 = vsel %vm118, %v560, 0
    %565 = vmatpush.xpose.msra.mxu0 0.0
    %566 = vmatpush.xpose.msra.mxu0 0.0
    %567 = vmatpush.xpose.msra.mxu0 0.0
    %568 = vmatpush.xpose.msra.mxu0 0.0
    %569 = vmatpush.xpose.msra.mxu0 0.0
    %570 = vmatpush.xpose.msra.mxu0 0.0
    %571 = vmatpush.xpose.msra.mxu0 0.0
    %572 = vmatpush.xpose.msra.mxu0 0.0
    %573 = vmatpush.xpose.msra.mxu0 0.0
    %574 = vmatpush.xpose.msra.mxu0 0.0
    %575 = vmatpush.xpose.msra.mxu0 0.0
    %576 = vmatpush.xpose.msra.mxu0 0.0
    %577 = vmatpush.xpose.msra.mxu0 0.0
    %578 = vmatpush.xpose.msra.mxu0 0.0
    %579 = vmatpush.xpose.msra.mxu0 0.0
    %580 = vmatpush.xpose.msra.mxu0 %v563
    %581 = vmatmul.f32.gmra.mxu0 %v561
    %v582 = vpop.f32.mrf.mxu0
    %v583 = vadd.f32 0.0, %v582
    %584 = vdwg.mxu0
    %v585 = vmul.f32 %v583, 0.35355338
    %v586 = vadd.f32 %v585, %v114
    %v587 = vsel %vm118, %v586, -inf
    %588 = vmax.xlane.f32.xlu0 %v587
    %v589 = vpop.xlane.xlu0 %588
    %v590 = vsub.f32 %v586, %v589
    %v591 = vmul.f32 %v590, 1.442695
    %v592 = vpow.pop %v591
    %v593 = vsel %vm118, %v592, 0.0
    %594 = vadd.xlane.f32.xlu0 %v593
    %v595 = vpop.xlane.xlu0 %594
    %v596 = vrcp.pop %v595
    %v597 = vmul.f32 %v592, %v596
    %598 = vrot.lane.b32.xlu0 %v107, 56
    %v599 = vpop.permute.xlu0 %598
    %v602 = vsel %vm118, %v597, 0
    %604 = vmatpush.msra.mxu0 0.0
    %605 = vmatpush.msra.mxu0 0.0
    %606 = vmatpush.msra.mxu0 0.0
    %607 = vmatpush.msra.mxu0 0.0
    %608 = vmatpush.msra.mxu0 0.0
    %609 = vmatpush.msra.mxu0 0.0
    %610 = vmatpush.msra.mxu0 0.0
    %611 = vmatpush.msra.mxu0 0.0
    %612 = vmatpush.msra.mxu0 0.0
    %613 = vmatpush.msra.mxu0 0.0
    %614 = vmatpush.msra.mxu0 0.0
    %615 = vmatpush.msra.mxu0 0.0
    %616 = vmatpush.msra.mxu0 0.0
    %617 = vmatpush.msra.mxu0 0.0
    %618 = vmatpush.msra.mxu0 0.0
    %619 = vmatpush.msra.mxu0 %v599
    %620 = vmatmul.f32.gmra.mxu0 %v602
    %v621 = vpop.f32.mrf.mxu0
    %v622 = vadd.f32 0.0, %v621
    %623 = vdwg.mxu0
    %v625 = vsel %vm118, %v622, 0
    %627 = vmatpush.msra.mxu0 0.0
    %628 = vmatpush.msra.mxu0 0.0
    %629 = vmatpush.msra.mxu0 0.0
    %630 = vmatpush.msra.mxu0 0.0
    %631 = vmatpush.msra.mxu0 0.0
    %632 = vmatpush.msra.mxu0 0.0
    %633 = vmatpush.msra.mxu0 0.0
    %634 = vmatpush.msra.mxu0 0.0
    %635 = vmatpush.msra.mxu0 0.0
    %636 = vmatpush.msra.mxu0 0.0
    %637 = vmatpush.msra.mxu0 0.0
    %638 = vmatpush.msra.mxu0 0.0
    %639 = vmatpush.msra.mxu0 0.0
    %640 = vmatpush.msra.mxu0 0.0
    %641 = vmatpush.msra.mxu0 0.0
    %642 = vmatpush.msra.mxu0 %v68
    %643 = vmatmul.f32.gmra.mxu0 %v625
    %v644 = vpop.f32.mrf.mxu0
    %v645 = vadd.f32 0.0, %v644
    %646 = vdwg.mxu0
    %v648 = vsel %vm118, %v555, 0
    %650 = vmatpush.msra.mxu0 0.0
    %651 = vmatpush.msra.mxu0 0.0
    %652 = vmatpush.msra.mxu0 0.0
    %653 = vmatpush.msra.mxu0 0.0
    %654 = vmatpush.msra.mxu0 0.0
    %655 = vmatpush.msra.mxu0 0.0
    %656 = vmatpush.msra.mxu0 0.0
    %657 = vmatpush.msra.mxu0 0.0
    %658 = vmatpush.msra.mxu0 0.0
    %659 = vmatpush.msra.mxu0 0.0
    %660 = vmatpush.msra.mxu0 0.0
    %661 = vmatpush.msra.mxu0 0.0
    %662 = vmatpush.msra.mxu0 0.0
    %663 = vmatpush.msra.mxu0 0.0
    %664 = vmatpush.msra.mxu0 0.0
    %665 = vmatpush.msra.mxu0 %v67
    %666 = vmatmul.f32.gmra.mxu0 %v648
    %v667 = vpop.f32.mrf.mxu0
    %v668 = vadd.f32 %v645, %v667
    %669 = vdwg.mxu0
    %670 = vrot.lane.b32.xlu0 %v107, 112
    %v671 = vpop.permute.xlu0 %670
    %672 = vrot.lane.b32.xlu0 %v107, 80
    %v673 = vpop.permute.xlu0 %672
    %v674 = vsel %vm118, %v671, 0
    %v676 = vsel %vm118, %v673, 0
    %678 = vmatpush.xpose.msra.mxu0 0.0
    %679 = vmatpush.xpose.msra.mxu0 0.0
    %680 = vmatpush.xpose.msra.mxu0 0.0
    %681 = vmatpush.xpose.msra.mxu0 0.0
    %682 = vmatpush.xpose.msra.mxu0 0.0
    %683 = vmatpush.xpose.msra.mxu0 0.0
    %684 = vmatpush.xpose.msra.mxu0 0.0
    %685 = vmatpush.xpose.msra.mxu0 0.0
    %686 = vmatpush.xpose.msra.mxu0 0.0
    %687 = vmatpush.xpose.msra.mxu0 0.0
    %688 = vmatpush.xpose.msra.mxu0 0.0
    %689 = vmatpush.xpose.msra.mxu0 0.0
    %690 = vmatpush.xpose.msra.mxu0 0.0
    %691 = vmatpush.xpose.msra.mxu0 0.0
    %692 = vmatpush.xpose.msra.mxu0 0.0
    %693 = vmatpush.xpose.msra.mxu0 %v676
    %694 = vmatmul.f32.gmra.mxu0 %v674
    %v695 = vpop.f32.mrf.mxu0
    %v696 = vadd.f32 0.0, %v695
    %697 = vdwg.mxu0
    %v698 = vmul.f32 %v696, 0.35355338
    %v699 = vadd.f32 %v698, %v114
    %v700 = vsel %vm118, %v699, -inf
    %701 = vmax.xlane.f32.xlu0 %v700
    %v702 = vpop.xlane.xlu0 %701
    %v703 = vsub.f32 %v699, %v702
    %v704 = vmul.f32 %v703, 1.442695
    %v705 = vpow.pop %v704
    %v706 = vsel %vm118, %v705, 0.0
    %707 = vadd.xlane.f32.xlu0 %v706
    %v708 = vpop.xlane.xlu0 %707
    %v709 = vrcp.pop %v708
    %v710 = vmul.f32 %v705, %v709
    %711 = vrot.lane.b32.xlu0 %v107, 48
    %v712 = vpop.permute.xlu0 %711
    %v715 = vsel %vm118, %v710, 0
    %717 = vmatpush.msra.mxu0 0.0
    %718 = vmatpush.msra.mxu0 0.0
    %719 = vmatpush.msra.mxu0 0.0
    %720 = vmatpush.msra.mxu0 0.0
    %721 = vmatpush.msra.mxu0 0.0
    %722 = vmatpush.msra.mxu0 0.0
    %723 = vmatpush.msra.mxu0 0.0
    %724 = vmatpush.msra.mxu0 0.0
    %725 = vmatpush.msra.mxu0 0.0
    %726 = vmatpush.msra.mxu0 0.0
    %727 = vmatpush.msra.mxu0 0.0
    %728 = vmatpush.msra.mxu0 0.0
    %729 = vmatpush.msra.mxu0 0.0
    %730 = vmatpush.msra.mxu0 0.0
    %731 = vmatpush.msra.mxu0 0.0
    %732 = vmatpush.msra.mxu0 %v712
    %733 = vmatmul.f32.gmra.mxu0 %v715
    %v734 = vpop.f32.mrf.mxu0
    %v735 = vadd.f32 0.0, %v734
    %736 = vdwg.mxu0
    %v738 = vsel %vm118, %v735, 0
    %740 = vmatpush.msra.mxu0 0.0
    %741 = vmatpush.msra.mxu0 0.0
    %742 = vmatpush.msra.mxu0 0.0
    %743 = vmatpush.msra.mxu0 0.0
    %744 = vmatpush.msra.mxu0 0.0
    %745 = vmatpush.msra.mxu0 0.0
    %746 = vmatpush.msra.mxu0 0.0
    %747 = vmatpush.msra.mxu0 0.0
    %748 = vmatpush.msra.mxu0 0.0
    %749 = vmatpush.msra.mxu0 0.0
    %750 = vmatpush.msra.mxu0 0.0
    %751 = vmatpush.msra.mxu0 0.0
    %752 = vmatpush.msra.mxu0 0.0
    %753 = vmatpush.msra.mxu0 0.0
    %754 = vmatpush.msra.mxu0 0.0
    %755 = vmatpush.msra.mxu0 %v69
    %756 = vmatmul.f32.gmra.mxu0 %v738
    %v757 = vpop.f32.mrf.mxu0
    %v758 = vadd.f32 0.0, %v757
    %759 = vdwg.mxu0
    %v760 = vadd.f32 %v668, %v758
    %761 = vrot.lane.b32.xlu0 %v107, 104
    %v762 = vpop.permute.xlu0 %761
    %763 = vrot.lane.b32.xlu0 %v107, 72
    %v764 = vpop.permute.xlu0 %763
    %v765 = vsel %vm118, %v762, 0
    %v767 = vsel %vm118, %v764, 0
    %769 = vmatpush.xpose.msra.mxu0 0.0
    %770 = vmatpush.xpose.msra.mxu0 0.0
    %771 = vmatpush.xpose.msra.mxu0 0.0
    %772 = vmatpush.xpose.msra.mxu0 0.0
    %773 = vmatpush.xpose.msra.mxu0 0.0
    %774 = vmatpush.xpose.msra.mxu0 0.0
    %775 = vmatpush.xpose.msra.mxu0 0.0
    %776 = vmatpush.xpose.msra.mxu0 0.0
    %777 = vmatpush.xpose.msra.mxu0 0.0
    %778 = vmatpush.xpose.msra.mxu0 0.0
    %779 = vmatpush.xpose.msra.mxu0 0.0
    %780 = vmatpush.xpose.msra.mxu0 0.0
    %781 = vmatpush.xpose.msra.mxu0 0.0
    %782 = vmatpush.xpose.msra.mxu0 0.0
    %783 = vmatpush.xpose.msra.mxu0 0.0
    %784 = vmatpush.xpose.msra.mxu0 %v767
    %785 = vmatmul.f32.gmra.mxu0 %v765
    %v786 = vpop.f32.mrf.mxu0
    %v787 = vadd.f32 0.0, %v786
    %788 = vdwg.mxu0
    %v789 = vmul.f32 %v787, 0.35355338
    %v790 = vadd.f32 %v789, %v114
    %v791 = vsel %vm118, %v790, -inf
    %792 = vmax.xlane.f32.xlu0 %v791
    %v793 = vpop.xlane.xlu0 %792
    %v794 = vsub.f32 %v790, %v793
    %v795 = vmul.f32 %v794, 1.442695
    %v796 = vpow.pop %v795
    %v797 = vsel %vm118, %v796, 0.0
    %798 = vadd.xlane.f32.xlu0 %v797
    %v799 = vpop.xlane.xlu0 %798
    %v800 = vrcp.pop %v799
    %v801 = vmul.f32 %v796, %v800
    %802 = vrot.lane.b32.xlu0 %v107, 40
    %v803 = vpop.permute.xlu0 %802
    %v806 = vsel %vm118, %v801, 0
    %808 = vmatpush.msra.mxu0 0.0
    %809 = vmatpush.msra.mxu0 0.0
    %810 = vmatpush.msra.mxu0 0.0
    %811 = vmatpush.msra.mxu0 0.0
    %812 = vmatpush.msra.mxu0 0.0
    %813 = vmatpush.msra.mxu0 0.0
    %814 = vmatpush.msra.mxu0 0.0
    %815 = vmatpush.msra.mxu0 0.0
    %816 = vmatpush.msra.mxu0 0.0
    %817 = vmatpush.msra.mxu0 0.0
    %818 = vmatpush.msra.mxu0 0.0
    %819 = vmatpush.msra.mxu0 0.0
    %820 = vmatpush.msra.mxu0 0.0
    %821 = vmatpush.msra.mxu0 0.0
    %822 = vmatpush.msra.mxu0 0.0
    %823 = vmatpush.msra.mxu0 %v803
    %824 = vmatmul.f32.gmra.mxu0 %v806
    %v825 = vpop.f32.mrf.mxu0
    %v826 = vadd.f32 0.0, %v825
    %827 = vdwg.mxu0
    %v829 = vsel %vm118, %v826, 0
    %831 = vmatpush.msra.mxu0 0.0
    %832 = vmatpush.msra.mxu0 0.0
    %833 = vmatpush.msra.mxu0 0.0
    %834 = vmatpush.msra.mxu0 0.0
    %835 = vmatpush.msra.mxu0 0.0
    %836 = vmatpush.msra.mxu0 0.0
    %837 = vmatpush.msra.mxu0 0.0
    %838 = vmatpush.msra.mxu0 0.0
    %839 = vmatpush.msra.mxu0 0.0
    %840 = vmatpush.msra.mxu0 0.0
    %841 = vmatpush.msra.mxu0 0.0
    %842 = vmatpush.msra.mxu0 0.0
    %843 = vmatpush.msra.mxu0 0.0
    %844 = vmatpush.msra.mxu0 0.0
    %845 = vmatpush.msra.mxu0 0.0
    %846 = vmatpush.msra.mxu0 %v70
    %847 = vmatmul.f32.gmra.mxu0 %v829
    %v848 = vpop.f32.mrf.mxu0
    %v849 = vadd.f32 0.0, %v848
    %850 = vdwg.mxu0
    %v851 = vadd.f32 %v760, %v849
    %852 = vrot.lane.b32.xlu0 %v597, 8
    %v853 = vpop.permute.xlu0 %852
    %855 = vrot.lane.b32.xlu0 %v710, 16
    %v856 = vpop.permute.xlu0 %855
    %858 = vrot.lane.b32.xlu0 %v801, 24
    %v859 = vpop.permute.xlu0 %858
    %v861 = vsel %vm118, %v530, %v853
    %v862 = vsel %vm487, %v861, %v856
    %v863 = vsel %vm489, %v862, %v859
    %v864 = vld [vmem:[%s5] sm:$0x1]
    %v866 = vperm.slane %v864, 0
    %v868 = vadd.f32 %v476, %v866
    %v869 = vadd.f32 %v851, %v866
    %v870 = vadd.f32 %v65, %v868
    %v871 = vadd.f32 %v66, %v869
    %v872 = vsel %vm79, %v870, 0.0
    %873 = vadd.xlane.f32.xlu0 %v872
    %v874 = vpop.xlane.xlu0 %873
    %v875 = vsel %vm79, %v871, 0.0
    %876 = vadd.xlane.f32.xlu0 %v875
    %v877 = vpop.xlane.xlu0 %876
    %v878 = vrcp.pop 32.0
    %v879 = vmul.f32 32.0, %v878
    %v880 = vsub.f32 1.0, %v879
    %v881 = vmul.f32 %v878, %v880
    %v882 = vadd.f32 %v878, %v881
    %vm883 = vweird.f32 %v878
    %v884 = vsel %vm883, %v878, %v882
    %v885 = vmul.f32 %v874, %v884
    %v886 = vmul.f32 %v877, %v884
    %v887 = vsub.f32 %v870, %v885
    %v888 = vsub.f32 %v871, %v886
    %v889 = vmul.f32 %v887, %v887
    %v890 = vmul.f32 %v888, %v888
    %v891 = vsel %vm79, %v889, 0.0
    %892 = vadd.xlane.f32.xlu0 %v891
    %v893 = vpop.xlane.xlu0 %892
    %v894 = vsel %vm79, %v890, 0.0
    %895 = vadd.xlane.f32.xlu0 %v894
    %v896 = vpop.xlane.xlu0 %895
    %v897 = vmul.f32 %v893, %v884
    %v898 = vmul.f32 %v896, %v884
    %v899 = vadd.f32 %v897, 1e-06
    %v900 = vadd.f32 %v898, 1e-06
    %v901 = vrsqrt.pop %v899
    %v902 = vmul.f32 %v901, %v899
    %v903 = vmul.f32 %v902, %v901
    %v904 = vmul.f32 0.5, %v903
    %v905 = vsub.f32 1.5, %v904
    %v906 = vmul.f32 %v901, %v905
    %vm907 = vweird.f32 %v899
    %vm908 = vweird.f32 %v901
    %vm909 = vmor %vm907, %vm908
    %v910 = vsel %vm909, %v901, %v906
    %v911 = vrsqrt.pop %v900
    %v912 = vmul.f32 %v911, %v900
    %v913 = vmul.f32 %v912, %v911
    %v914 = vmul.f32 0.5, %v913
    %v915 = vsub.f32 1.5, %v914
    %v916 = vmul.f32 %v911, %v915
    %vm917 = vweird.f32 %v900
    %vm918 = vweird.f32 %v911
    %vm919 = vmor %vm917, %vm918
    %v920 = vsel %vm919, %v911, %v916
    %v921 = vmul.f32 %v887, %v910
    %v922 = vmul.f32 %v888, %v920
    %v923 = vld [vmem:[%s6] sm:$0x1]
    %v925 = vperm.slane %v923, 0
    %v927 = vmul.f32 %v921, %v925
    %v928 = vmul.f32 %v922, %v925
    %v929 = vld [vmem:[%s7] sm:$0x1]
    %v931 = vperm.slane %v929, 0
    %v933 = vadd.f32 %v927, %v931
    %v934 = vadd.f32 %v928, %v931
    %935 = vst.msk [vmem:[#allocation7] sm:$0xff] %vm79, %v933
    %936 = vst.msk [vmem:[#allocation7 + $0x8] sm:$0xff] %vm79, %v934
    %937 = vst.msk [vmem:[#allocation8] sm:$0xff] %vm79, %v490
    %938 = vst.msk [vmem:[#allocation8 + $0x8] sm:$0xff] %vm79, %v863
    // Predicated region
    $region42: #{tpu_custom_call.1} parent=1 // pred_check
      _
    $region43: #{tpu_custom_call.1} parent=1 // pred_check_branch
      %940 = sbr.rel (0) target = $region45
    $region44: #{tpu_custom_call.1} parent=1 // pred_region
      %942 = vsyncadd [#allocation4], 0
      %s943 = sshll.u32 [#allocation7], 4
      %s944 = int_to_ptr.vmem [resolvable:$true] %s943
      %s945 = sshll.u32 %s8, 4
      %s946 = int_to_ptr.hbm [resolvable:$true] %s945
      %951 = dma.vmem_to_hbm [thread:$0]  %s944, 256, %s946, [#allocation4], 128, 128, 8
    $region45: #{tpu_custom_call.1} parent=1 // pred_fallthru
      _
    // Predicated region
    $region46: #{tpu_custom_call.1} parent=1 // pred_check
      _
    $region47: #{tpu_custom_call.1} parent=1 // pred_check_branch
      %953 = sbr.rel (0) target = $region49
    $region48: #{tpu_custom_call.1} parent=1 // pred_region
      %955 = vsyncadd [#allocation9], 0
      %s956 = sshll.u32 [#allocation8], 4
      %s957 = int_to_ptr.vmem [resolvable:$true] %s956
      %s958 = sshll.u32 %s9, 4
      %s959 = int_to_ptr.hbm [resolvable:$true] %s958
      %964 = dma.vmem_to_hbm [thread:$0]  %s957, 256, %s959, [#allocation9], 128, 128, 8
    $region49: #{tpu_custom_call.1} parent=1 // pred_fallthru
      _
    // Predicated region
    $region50: #{tpu_custom_call.1} parent=1 // pred_check
      _
    $region51: #{tpu_custom_call.1} parent=1 // pred_check_branch
      %966 = sbr.rel (0) target = $region53
    $region52: #{tpu_custom_call.1} parent=1 // pred_region
      %968 = dma.done [#allocation4], 256
    $region53: #{tpu_custom_call.1} parent=1 // pred_fallthru
      _
    // Predicated region
    $region54: #{tpu_custom_call.1} parent=1 // pred_check
      _
    $region55: #{tpu_custom_call.1} parent=1 // pred_check_branch
      %970 = sbr.rel (0) target = $region57
    $region56: #{tpu_custom_call.1} parent=1 // pred_region
      %972 = dma.done [#allocation9], 256
    $region57: #{tpu_custom_call.1} parent=1 // pred_fallthru
      _
    %973 = vsyncpa [#allocation3], 1
    %974 = vsyncpa [#allocation6], 1
    %975 = vsyncpa [#allocation4], 1
    %976 = vsyncpa [#allocation9], 1

</llo_original>
